<compile_context>
chip_gen: v6e
topology: v6e:2x2x1
jax: 0.10.0
libtpu: 0.0.40
codegen_flags: <defaults>
</compile_context>

<pallas_src>
import functools

import jax
import jax.numpy as jnp
import numpy as np
from jax.experimental import pallas as pl
from jax.experimental.pallas import tpu as pltpu


def _round_up(x, m):
    return ((x + m - 1) // m) * m


def _contrastive_kernel(x_ref, yt_ref, bias_ref, o_ref, *, l_pad, t):
    """One (batch, query-tile) grid step.

    x_ref:    (1, Qt, D)      query features
    yt_ref:   (1, D, L_pad)   text features, pre-transposed in the wrapper
    bias_ref: (1, 1, L_pad)   f32 additive bias: 0 keep / -inf masked+padded
    o_ref:    (1, Qt, T)      output tile
    """
    x = x_ref[0]                                       # (Qt, D)
    yt = yt_ref[0]                                     # (D, L_pad)
    bias = bias_ref[0]                                 # (1, L_pad)

    # Canonical (M,K) x (K,N) contraction -> feeds the MXU directly, no
    # in-kernel relayout of the text operand on any grid step.
    scores = jax.lax.dot_general(
        x, yt, (((1,), (0,)), ((), ())),
        preferred_element_type=jnp.float32)            # (Qt, L_pad) f32
    scores = scores + bias                             # mask + text padding

    o_ref[0, :, :l_pad] = scores.astype(o_ref.dtype)
    if l_pad < t:  # static Python condition; lane-aligned -inf tail fill
        o_ref[0, :, l_pad:] = jnp.full(
            (x.shape[0], t - l_pad), -jnp.inf, dtype=o_ref.dtype)


def _choose_q_tile(nq, b, d, t, x_itemsize, out_itemsize,
                   max_tile=1024, vmem_budget=16 * 1024 * 1024):
    """Sublane-aligned query tile: as large as the VMEM budget allows."""
    # Per-query-row VMEM that scales with q_tile (x in + out), double-buffered.
    per_row = 2 * (d * x_itemsize + t * out_itemsize)
    cap_rows = max(8, (vmem_budget // per_row) // 8 * 8)
    q_tile = max(8, min(_round_up(nq, 8), max_tile, cap_rows))
    # v7x megacore: guarantee >=2 "parallel" grid steps even when B == 1 so
    # both TensorCores get work.  Harmless on v5e/v6e.
    if b == 1 and pl.cdiv(nq, q_tile) < 2 and nq > 8:
        q_tile = max(8, _round_up(pl.cdiv(nq, 2), 8))
    return q_tile


def contrastive_embed(x, encoded_text, text_token_mask, max_text_len=256,
                      out_dtype=jnp.float32):
    """x: (B, Nq, D); encoded_text: (B, L, D); text_token_mask: (B, L) bool.

    Returns (B, Nq, max_text_len) in `out_dtype` (f32 default, matching the
    torch reference).  `max_text_len` should be a multiple of 128 for
    unmasked lane-aligned stores (correct either way).
    """
    B, Nq, D = x.shape
    _, L, _ = encoded_text.shape
    T = max_text_len
    assert L <= T, "text length exceeds max_text_len"

    y = encoded_text.astype(x.dtype)   # single MXU operand dtype

    # Pad the text axis only to the next lane-aligned multiple of 128 (capped
    # at T); padded columns are forced to -inf via the bias below.
    L_pad = min(_round_up(L, 128), T)
    if L_pad > L:
        y = jnp.pad(y, ((0, 0), (0, L_pad - L), (0, 0)))
    # One-time wrapper transpose of the (small) text tensor, amortized over
    # every query tile within a batch.
    yt = jnp.transpose(y, (0, 2, 1))                   # (B, D, L_pad)

    # Additive f32 bias: 0 where token kept, -inf where masked or padded.
    bias = jnp.where(text_token_mask, jnp.float32(0), jnp.float32(-jnp.inf))
    if L_pad > L:
        bias = jnp.pad(bias, ((0, 0), (0, L_pad - L)),
                       constant_values=float("-inf"))
    bias = bias[:, None, :].astype(jnp.float32)        # (B, 1, L_pad)

    q_tile = _choose_q_tile(Nq, B, D, T,
                            jnp.dtype(x.dtype).itemsize,
                            jnp.dtype(out_dtype).itemsize)
    grid = (B, pl.cdiv(Nq, q_tile))                    # ragged last q block OK

    kernel = functools.partial(_contrastive_kernel, l_pad=L_pad, t=T)

    out = pl.pallas_call(
        kernel,
        out_shape=jax.ShapeDtypeStruct((B, Nq, T), out_dtype),
        grid_spec=pltpu.PrefetchScalarGridSpec(
            num_scalar_prefetch=0,
            grid=grid,
            in_specs=[
                pl.BlockSpec((1, q_tile, D), lambda b, q: (b, q, 0)),
                pl.BlockSpec((1, D, L_pad), lambda b, q: (b, 0, 0)),
                pl.BlockSpec((1, 1, L_pad), lambda b, q: (b, 0, 0)),
            ],
            out_specs=pl.BlockSpec((1, q_tile, T), lambda b, q: (b, q, 0)),
        ),
        compiler_params=pltpu.CompilerParams(
            dimension_semantics=("parallel", "parallel"),
        ),
    )(x, yt, bias)
    return out


def _reference(x, encoded_text, text_token_mask, max_text_len=256):
    res = jnp.einsum("bqd,bld->bql", x.astype(jnp.float32),
                     encoded_text.astype(jnp.float32))
    res = jnp.where(text_token_mask[:, None, :], res, -jnp.inf)
    B, Nq, L = res.shape
    out = jnp.full((B, Nq, max_text_len), -jnp.inf, dtype=jnp.float32)
    return out.at[..., :L].set(res)


def _check(x, y, m, max_text_len, rtol, atol):
    out = jax.block_until_ready(contrastive_embed(x, y, m, max_text_len))
    ref = _reference(x, y, m, max_text_len)
    np.testing.assert_allclose(np.asarray(out), np.asarray(ref),
                               rtol=rtol, atol=atol)


if __name__ == "__main__":
    key = jax.random.PRNGKey(0)
    MAX_TEXT_LEN = 256
    ks = jax.random.split(key, 9)

    # Case 1: aligned small shapes, f32.
    B, Nq, D, L = 2, 16, 32, 8
    x = jax.random.normal(ks[0], (B, Nq, D), dtype=jnp.float32)
    y = jax.random.normal(ks[1], (B, L, D), dtype=jnp.float32)
    m = jax.random.uniform(ks[2], (B, L)) > 0.3
    _check(x, y, m, MAX_TEXT_LEN, 1e-5, 1e-5)

    # Case 2: unaligned Nq / L -> exercises the ragged boundary query block
    # and the -inf tail fill (no wrapper pad / post-slice anymore).
    B2, Nq2, D2, L2 = 2, 12, 32, 5
    x2 = jax.random.normal(ks[3], (B2, Nq2, D2), dtype=jnp.float32)
    y2 = jax.random.normal(ks[4], (B2, L2, D2), dtype=jnp.float32)
    m2 = jax.random.uniform(ks[5], (B2, L2)) > 0.3
    _check(x2, y2, m2, MAX_TEXT_LEN, 1e-5, 1e-5)

    # Case 3: B == 1 -> query axis forced into >=2 parallel tiles (v7x).
    x3 = jax.random.normal(ks[6], (1, 16, 32), dtype=jnp.float32)
    y3 = jax.random.normal(ks[7], (1, 8, 32), dtype=jnp.float32)
    m3 = jax.random.uniform(ks[8], (1, 8)) > 0.3
    _check(x3, y3, m3, MAX_TEXT_LEN, 1e-5, 1e-5)

    # Case 4: bf16 inputs (bf16 MXU multiply, f32 accumulate) -> looser tol.
    _check(x.astype(jnp.bfloat16), y.astype(jnp.bfloat16), m,
           MAX_TEXT_LEN, 1e-2, 1e-2)

    print("KERNEL_OK")
</pallas_src>

<mosaic_0001>
module attributes {stable_mosaic.version = 11 : i64} {
  func.func @_contrastive_kernel(%arg0: i32, %arg1: i32, %arg2: memref<1x16x32xf32, #tpu.memory_space<vmem>>, %arg3: memref<1x32x128xf32, #tpu.memory_space<vmem>>, %arg4: memref<1x1x128xf32, #tpu.memory_space<vmem>>, %arg5: memref<1x16x256xf32, #tpu.memory_space<vmem>>) attributes {dimension_semantics = [#tpu.dimension_semantics<parallel>, #tpu.dimension_semantics<parallel>], iteration_bounds = array<i64: 2, 1>, scalar_prefetch = 0 : i64, scratch_operands = 0 : i64, tpu.core_type = #tpu.core_type<tc>, window_params = [{transform_indices = @transform_0, window_bounds = array<i64: 1, 16, 32>}, {transform_indices = @transform_1, window_bounds = array<i64: 1, 32, 128>}, {transform_indices = @transform_2, window_bounds = array<i64: 1, 1, 128>}, {transform_indices = @transform_3, window_bounds = array<i64: 1, 16, 256>}]} {
    %c0 = arith.constant 0 : index
    %c0_0 = arith.constant 0 : index
    %c0_1 = arith.constant 0 : index
    %0 = vector.load %arg2[%c0, %c0_0, %c0_1] : memref<1x16x32xf32, #tpu.memory_space<vmem>>, vector<1x16x32xf32>
    %1 = vector.shape_cast %0 : vector<1x16x32xf32> to vector<16x32xf32>
    %c0_2 = arith.constant 0 : index
    %c0_3 = arith.constant 0 : index
    %c0_4 = arith.constant 0 : index
    %2 = vector.load %arg3[%c0_2, %c0_3, %c0_4] : memref<1x32x128xf32, #tpu.memory_space<vmem>>, vector<1x32x128xf32>
    %3 = vector.shape_cast %2 : vector<1x32x128xf32> to vector<32x128xf32>
    %c0_5 = arith.constant 0 : index
    %c0_6 = arith.constant 0 : index
    %c0_7 = arith.constant 0 : index
    %4 = vector.load %arg4[%c0_5, %c0_6, %c0_7] : memref<1x1x128xf32, #tpu.memory_space<vmem>>, vector<1x1x128xf32>
    %5 = vector.shape_cast %4 : vector<1x1x128xf32> to vector<1x128xf32>
    %cst = arith.constant dense<0.000000e+00> : vector<16x128xf32>
    %6 = tpu.matmul %1, %3, %cst {dimension_numbers = #tpu.dot_dimension_numbers<[1], [0], [0], [1], [0, 0, 1, 1], [], []>} : vector<16x32xf32>, vector<32x128xf32>, vector<16x128xf32> -> vector<16x128xf32>
    %7 = vector.broadcast %5 : vector<1x128xf32> to vector<16x128xf32>
    %8 = arith.addf %6, %7 : vector<16x128xf32>
    %c0_8 = arith.constant 0 : index
    %c0_9 = arith.constant 0 : index
    %c0_10 = arith.constant 0 : index
    %9 = vector.load %arg5[%c0_8, %c0_9, %c0_10] : memref<1x16x256xf32, #tpu.memory_space<vmem>>, vector<1x16x128xf32>
    %10 = vector.shape_cast %9 : vector<1x16x128xf32> to vector<16x128xf32>
    %11 = vector.shape_cast %8 : vector<16x128xf32> to vector<1x16x128xf32>
    tpu.vector_store %arg5[%c0_8, %c0_9, %c0_10], %11 {strides = array<i32>} : memref<1x16x256xf32, #tpu.memory_space<vmem>>, vector<1x16x128xf32>,
    %cst_11 = arith.constant 0xFF800000 : f32
    %12 = vector.broadcast %cst_11 : f32 to vector<16x128xf32>
    %c0_12 = arith.constant 0 : index
    %c0_13 = arith.constant 0 : index
    %c128 = arith.constant 128 : index
    %13 = vector.load %arg5[%c0_12, %c0_13, %c128] : memref<1x16x256xf32, #tpu.memory_space<vmem>>, vector<1x16x128xf32>
    %14 = vector.shape_cast %13 : vector<1x16x128xf32> to vector<16x128xf32>
    %15 = vector.shape_cast %12 : vector<16x128xf32> to vector<1x16x128xf32>
    tpu.vector_store %arg5[%c0_12, %c0_13, %c128], %15 {strides = array<i32>} : memref<1x16x256xf32, #tpu.memory_space<vmem>>, vector<1x16x128xf32>,
    return
  }
  func.func @transform_0(%arg0: i32, %arg1: i32) -> (i32, i32, i32) {
    %c0_i32 = arith.constant 0 : i32
    %c0_i32_0 = arith.constant 0 : i32
    return %arg0, %arg1, %c0_i32 : i32, i32, i32
  }
  func.func @transform_1(%arg0: i32, %arg1: i32) -> (i32, i32, i32) {
    %c0_i32 = arith.constant 0 : i32
    %c0_i32_0 = arith.constant 0 : i32
    %c0_i32_1 = arith.constant 0 : i32
    return %arg0, %c0_i32, %c0_i32_0 : i32, i32, i32
  }
  func.func @transform_2(%arg0: i32, %arg1: i32) -> (i32, i32, i32) {
    %c0_i32 = arith.constant 0 : i32
    %c0_i32_0 = arith.constant 0 : i32
    %c0_i32_1 = arith.constant 0 : i32
    return %arg0, %c0_i32, %c0_i32_0 : i32, i32, i32
  }
  func.func @transform_3(%arg0: i32, %arg1: i32) -> (i32, i32, i32) {
    %c0_i32 = arith.constant 0 : i32
    %c0_i32_0 = arith.constant 0 : i32
    return %arg0, %arg1, %c0_i32 : i32, i32, i32
  }
}

</mosaic_0001>

<llo_original>
// kernel: tpu_custom_call.1
$region0: #{tpu_custom_call.1}
  #allocation0 [shape = 'u32[]', space=smem, size = 0x4, offset = 0x4, fixed_abs, tag = 'smem constant byte address 0x4 - core index']
  #allocation1 [shape = 'u32[144,128]{1,0:T(1,128)}', space=vmem, size = 0x12000, scoped, tag = 'internal scratch']
  %s0 = inlined_call_operand.hbm [shape: f32[2,16,32], index: 0, kind: input, shape index: {}]
  %s1 = inlined_call_operand.hbm [shape: f32[2,32,128], index: 1, kind: input, shape index: {}]
  %s2 = inlined_call_operand.vmem [shape: f32[2,1,128], index: 2, kind: input, shape index: {}]
  %s3 = inlined_call_operand.hbm [shape: f32[2,16,256], index: 3, kind: output, shape index: {}]
  %s4 = sld [smem:[#allocation0]]
  $region53: #{tpu_custom_call.1} parent=0
    _
  %s6 = ssub.s32 1, %s4
  %s7 = scalar_select 0, %s6, %s4
  $region1: #{tpu_custom_call.1} parent=0
    #allocation2 [shape = 'u8[16384]{0}', space=vmem, size = 0x4000, scoped, tag = 'input window, operand 0']
    #allocation3 [shape = 's32[2]{0}', space=sflag, size = 0x8, scoped, tag = 'scoped memory for tpu_custom_call.1']
    #allocation4 [shape = 's32[2]{0}', space=sflag, size = 0x8, scoped, tag = 'scoped memory for tpu_custom_call.1']
    #allocation5 [shape = 'u8[32768]{0}', space=vmem, size = 0x8000, scoped, tag = 'input window, operand 1']
    #allocation6 [shape = 's32[2]{0}', space=sflag, size = 0x8, scoped, tag = 'scoped memory for tpu_custom_call.1']
    #allocation7 [shape = 'u8[32768]{0}', space=vmem, size = 0x8000, scoped, tag = 'output window, operand 0']
    %8 = vsyncpa [#allocation3], 0
    %s9 = scalar_lea.sflag [#allocation3], 1
    %10 = vsyncpa %s9, 0
    %11 = vsyncpa [#allocation6], 0
    %s12 = scalar_lea.sflag [#allocation6], 1
    %13 = vsyncpa %s12, 0
    %14 = vsyncpa [#allocation4], 0
    %s15 = scalar_lea.sflag [#allocation4], 1
    %16 = vsyncpa %s15, 0
    loop: start=0, step=1, limit=4
    $region2: #{tpu_custom_call.1} parent=1 // loop_pre_header
      _
    $region3: #{tpu_custom_call.1} parent=1 // loop_header
      %s18 = sphi 0, %s22
      %p19 = scmp.ge.s32.totalorder %s18, 4
      %s25 = sphi 0, %s37
      %s26 = sphi 0, %s33
      %s27 = sphi 0, %s25
      %s28 = sphi 0, %s26
      %s29 = sphi 0, %s27
      %s30 = sphi 0, %s28
      %s42 = sphi 0, %s44
      %s45 = sphi 0, %s42
      %s46 = sphi 0, %s45
      %s62 = sphi 0, %s46
      %s68 = sphi 0, %s70
      %s71 = sphi 0, %s68
      %s72 = sphi 0, %s71
      %s88 = sphi 0, %s72
      %s94 = sphi 0, %s96
      %s97 = sphi 0, %s94
      %s98 = sphi 0, %s97
      %s114 = sphi 0, %s98
      %s122 = sphi 0, %s124
      %s125 = sphi 0, %s122
      %s126 = sphi 0, %s125
      %s142 = sphi 0, %s126
    $region4: #{tpu_custom_call.1} parent=1 // loop_header_branch
      %21 = sbr.rel (%p19) target = $region8
    $region5: #{tpu_custom_call.1} parent=1 // loop_body
      %s23 = ssub.s32 %s18, 1
      %s24 = ssub.s32 %s18, 2
      %s31 = sadd.s32 1, %s26
      %p32 = scmp.ge.s32.totalorder %s31, 1
      %s33 = scalar_select %p32, 0, %s31
      %s34 = sadd.s32 1, %s25
      %s35 = scalar_select %p32, %s34, %s25
      %p36 = scmp.ge.s32.totalorder %s35, 2
      %s37 = scalar_select %p36, 0, %s35
      %s38 = ssub.s32 %s25, %s37
      %s39 = ssub.s32 %s26, %s33
      %s40 = sor.u32 %s38, %s39
      %p41 = scmp.eq.s32.totalorder %s40, 0
      %s43 = sadd.s32 %s42, 1
      %s44 = scalar_select %p41, %s42, %s43
      %p47 = pneg %p41
      %p48 = scmp.eq.s32.totalorder %s18, 1
      %p49 = por %p47, %p48
      %p50 = scmp.ne.s32.totalorder %s42, %s45
      %p51 = scmp.eq.s32.totalorder %s18, 0
      %p52 = por %p50, %p51
      %p53 = scmp.ne.s32.totalorder %s42, %s45
      %p54 = scmp.eq.s32.totalorder %s23, 1
      %p55 = por %p53, %p54
      %p56 = scmp.ne.s32.totalorder %s45, %s46
      %p57 = scmp.eq.s32.totalorder %s23, 0
      %p58 = por %p56, %p57
      %p59 = scmp.ne.s32.totalorder %s45, %s46
      %p60 = scmp.eq.s32.totalorder %s24, 1
      %p61 = por %p59, %p60
      %p63 = scmp.ne.s32.totalorder %s46, %s62
      %p64 = scmp.eq.s32.totalorder %s24, 0
      %p65 = por %p63, %p64
      %s66 = ssub.s32 %s25, %s37
      %p67 = scmp.eq.s32.totalorder %s66, 0
      %s69 = sadd.s32 %s68, 1
      %s70 = scalar_select %p67, %s68, %s69
      %p73 = pneg %p67
      %p74 = scmp.eq.s32.totalorder %s18, 1
      %p75 = por %p73, %p74
      %p76 = scmp.ne.s32.totalorder %s68, %s71
      %p77 = scmp.eq.s32.totalorder %s18, 0
      %p78 = por %p76, %p77
      %p79 = scmp.ne.s32.totalorder %s68, %s71
      %p80 = scmp.eq.s32.totalorder %s23, 1
      %p81 = por %p79, %p80
      %p82 = scmp.ne.s32.totalorder %s71, %s72
      %p83 = scmp.eq.s32.totalorder %s23, 0
      %p84 = por %p82, %p83
      %p85 = scmp.ne.s32.totalorder %s71, %s72
      %p86 = scmp.eq.s32.totalorder %s24, 1
      %p87 = por %p85, %p86
      %p89 = scmp.ne.s32.totalorder %s72, %s88
      %p90 = scmp.eq.s32.totalorder %s24, 0
      %p91 = por %p89, %p90
      %s92 = ssub.s32 %s25, %s37
      %p93 = scmp.eq.s32.totalorder %s92, 0
      %s95 = sadd.s32 %s94, 1
      %s96 = scalar_select %p93, %s94, %s95
      %p99 = pneg %p93
      %p100 = scmp.eq.s32.totalorder %s18, 1
      %p101 = por %p99, %p100
      %p102 = scmp.ne.s32.totalorder %s94, %s97
      %p103 = scmp.eq.s32.totalorder %s18, 0
      %p104 = por %p102, %p103
      %p105 = scmp.ne.s32.totalorder %s94, %s97
      %p106 = scmp.eq.s32.totalorder %s23, 1
      %p107 = por %p105, %p106
      %p108 = scmp.ne.s32.totalorder %s97, %s98
      %p109 = scmp.eq.s32.totalorder %s23, 0
      %p110 = por %p108, %p109
      %p111 = scmp.ne.s32.totalorder %s97, %s98
      %p112 = scmp.eq.s32.totalorder %s24, 1
      %p113 = por %p111, %p112
      %p115 = scmp.ne.s32.totalorder %s98, %s114
      %p116 = scmp.eq.s32.totalorder %s24, 0
      %p117 = por %p115, %p116
      %s118 = ssub.s32 %s25, %s37
      %s119 = ssub.s32 %s26, %s33
      %s120 = sor.u32 %s118, %s119
      %p121 = scmp.eq.s32.totalorder %s120, 0
      %s123 = sadd.s32 %s122, 1
      %s124 = scalar_select %p121, %s122, %s123
      %p127 = pneg %p121
      %p128 = scmp.eq.s32.totalorder %s18, 1
      %p129 = por %p127, %p128
      %p130 = scmp.ne.s32.totalorder %s122, %s125
      %p131 = scmp.eq.s32.totalorder %s18, 0
      %p132 = por %p130, %p131
      %p133 = scmp.ne.s32.totalorder %s122, %s125
      %p134 = scmp.eq.s32.totalorder %s23, 1
      %p135 = por %p133, %p134
      %p136 = scmp.ne.s32.totalorder %s125, %s126
      %p137 = scmp.eq.s32.totalorder %s23, 0
      %p138 = por %p136, %p137
      %p139 = scmp.ne.s32.totalorder %s125, %s126
      %p140 = scmp.eq.s32.totalorder %s24, 1
      %p141 = por %p139, %p140
      %p143 = scmp.ne.s32.totalorder %s126, %s142
      %p144 = scmp.eq.s32.totalorder %s24, 0
      %p145 = por %p143, %p144
      %p146 = scmp.le.s32.totalorder 1, %s18
      %p147 = scmp.lt.s32.totalorder %s18, 3
      %p148 = pnand %p146, %p147
      %p149 = pneg %p148
      // Predicated region
      $region9: #{tpu_custom_call.1} parent=5 // pred_check
        _
      $region10: #{tpu_custom_call.1} parent=5 // pred_check_branch
        %151 = sbr.rel (%p148) target = $region12
      $region11: #{tpu_custom_call.1} parent=5 // pred_region
        %s152 = ssub.s32 %s18, 1
      $region12: #{tpu_custom_call.1} parent=5 // pred_fallthru
        _
      %p153 = scmp.lt.s32.totalorder %s18, 2
      // Predicated region
      $region13: #{tpu_custom_call.1} parent=5 // pred_check
        %p154 = pneg %p153
      $region14: #{tpu_custom_call.1} parent=5 // pred_check_branch
        %156 = sbr.rel (%p154) target = $region16
      $region15: #{tpu_custom_call.1} parent=5 // pred_region
        // Predicated region
        $region17: #{tpu_custom_call.1} parent=15 // pred_check
          %p157 = pneg %p52
        $region18: #{tpu_custom_call.1} parent=15 // pred_check_branch
          %159 = sbr.rel (%p157) target = $region20
        $region19: #{tpu_custom_call.1} parent=15 // pred_region
          %s160 = sand.u32 %s42, 1
          %s161 = scalar_lea.sflag [#allocation3], %s160
          %s162 = sand.u32 %s42, 1
          %s163 = smul.addr %s162, 16
          %s164 = scalar_lea.vmem [#allocation2], %s163
          %s165 = smul.u32 2, %s26
          %s167 = ssub.s32 256, 256
          %168 = vsyncadd %s161, %s167
          %s169 = smul.addr %s25, 2
          %s170 = sadd.s32 %s165, %s169
          %s171 = smul.addr %s170, 128
          %s172 = scalar_lea.hbm %s0, %s171
          %s173 = sshll.u32 %s164, 4
          %s174 = int_to_ptr.vmem [resolvable:$true] %s173
          %179 = dma.hbm_to_vmem [thread:$0]  %s172, 256, %s174, %s161, 128, 128, 8
        $region20: #{tpu_custom_call.1} parent=15 // pred_fallthru
          _
        // Predicated region
        $region21: #{tpu_custom_call.1} parent=15 // pred_check
          %p180 = pneg %p78
        $region22: #{tpu_custom_call.1} parent=15 // pred_check_branch
          %182 = sbr.rel (%p180) target = $region24
        $region23: #{tpu_custom_call.1} parent=15 // pred_region
          %s183 = sand.u32 %s68, 1
          %s184 = scalar_lea.sflag [#allocation6], %s183
          %s185 = sand.u32 %s68, 1
          %s186 = smul.addr %s185, 32
          %s187 = scalar_lea.vmem [#allocation5], %s186
          %s189 = ssub.s32 512, 512
          %190 = vsyncadd %s184, %s189
          %s191 = smul.addr %s25, 4
          %s192 = smul.addr %s191, 128
          %s193 = scalar_lea.hbm %s1, %s192
          %s194 = sshll.u32 %s187, 4
          %s195 = int_to_ptr.vmem [resolvable:$true] %s194
          %200 = dma.hbm_to_vmem [thread:$0]  %s193, 512, %s195, %s184, 128, 128, 8
        $region24: #{tpu_custom_call.1} parent=15 // pred_fallthru
          _
        // Predicated region
        $region25: #{tpu_custom_call.1} parent=15 // pred_check
          %p201 = pneg %p104
        $region26: #{tpu_custom_call.1} parent=15 // pred_check_branch
          %203 = sbr.rel (%p201) target = $region28
        $region27: #{tpu_custom_call.1} parent=15 // pred_region
          %p204 = scmp.lt.s32.totalorder %s25, 1
          %s205 = scalar_select %p204, %s25, 1
          %s206 = scalar_lea.vmem %s2, %s205
        $region28: #{tpu_custom_call.1} parent=15 // pred_fallthru
          _
      $region16: #{tpu_custom_call.1} parent=5 // pred_fallthru
        _
      %p207 = scmp.le.s32.totalorder 1, %s18
      %p208 = scmp.lt.s32.totalorder %s18, 3
      %p209 = pnand %p207, %p208
      %p210 = pneg %p209
      // Predicated region
      $region29: #{tpu_custom_call.1} parent=5 // pred_check
        _
      $region30: #{tpu_custom_call.1} parent=5 // pred_check_branch
        %212 = sbr.rel (%p209) target = $region32
      $region31: #{tpu_custom_call.1} parent=5 // pred_region
        %s213 = ssub.s32 %s18, 1
        %s214 = sand.u32 %s45, 1
        %s215 = scalar_lea.sflag [#allocation3], %s214
        %s216 = sand.u32 %s45, 1
        %s217 = smul.addr %s216, 16
        %s218 = scalar_lea.vmem [#allocation2], %s217
        // Predicated region
        $region33: #{tpu_custom_call.1} parent=31 // pred_check
          %p219 = pneg %p58
        $region34: #{tpu_custom_call.1} parent=31 // pred_check_branch
          %221 = sbr.rel (%p219) target = $region36
        $region35: #{tpu_custom_call.1} parent=31 // pred_region
          %222 = dma.done %s215, 256
        $region36: #{tpu_custom_call.1} parent=31 // pred_fallthru
          _
        %s223 = sand.u32 %s71, 1
        %s224 = scalar_lea.sflag [#allocation6], %s223
        %s225 = sand.u32 %s71, 1
        %s226 = smul.addr %s225, 32
        %s227 = scalar_lea.vmem [#allocation5], %s226
        // Predicated region
        $region37: #{tpu_custom_call.1} parent=31 // pred_check
          %p228 = pneg %p84
        $region38: #{tpu_custom_call.1} parent=31 // pred_check_branch
          %230 = sbr.rel (%p228) target = $region40
        $region39: #{tpu_custom_call.1} parent=31 // pred_region
          %231 = dma.done %s224, 512
        $region40: #{tpu_custom_call.1} parent=31 // pred_fallthru
          _
        %s232 = sand.u32 %s45, 1
        %s233 = scalar_lea.sflag [#allocation3], %s232
        %s234 = sand.u32 %s45, 1
        %s235 = smul.addr %s234, 16
        %s236 = scalar_lea.vmem [#allocation2], %s235
        %p237 = pneg %p58
        %p238 = pneg %p55
        %s239 = sand.u32 %s71, 1
        %s240 = scalar_lea.sflag [#allocation6], %s239
        %s241 = sand.u32 %s71, 1
        %s242 = smul.addr %s241, 32
        %s243 = scalar_lea.vmem [#allocation5], %s242
        %p244 = pneg %p84
        %p245 = pneg %p81
        %p246 = scmp.lt.s32.totalorder %s27, 1
        %s247 = scalar_select %p246, %s27, 1
        %s248 = scalar_lea.vmem %s2, %s247
        %p249 = pneg %p110
        %p250 = pneg %p107
        %p251 = pneg %p138
        %p252 = pneg %p135
        %s253 = sand.u32 %s125, 1
        %s254 = scalar_lea.sflag [#allocation4], %s253
        %s255 = sand.u32 %s125, 1
        %s256 = smul.addr %s255, 32
        %s257 = scalar_lea.vmem [#allocation7], %s256
        %s258 = smul.u32 2, %s28
        %p259 = scmp.lt.s32.totalorder %s27, 1
        %s260 = scalar_select %p259, %s27, 1
        %s261 = scalar_lea.vmem %s2, %s260
        %s262 = smul.u32 2, %s28
        %v263 = vld [vmem:[%s218] sm:$0xff]
        %v264 = vld [vmem:[%s218 + $0x8] sm:$0xff]
        %v265 = vld [vmem:[%s227] sm:$0xff]
        %v266 = vld [vmem:[%s227 + $0x8] sm:$0xff]
        %v267 = vld [vmem:[%s227 + $0x10] sm:$0xff]
        %v268 = vld [vmem:[%s227 + $0x18] sm:$0xff]
        %v269 = vld [vmem:[%s261] sm:$0x1]
        %v271 = vlaneseq
        %v272 = vshrl.u32 %v271, 7
        %v273 = vsub.s32 0, %v272
        %v274 = vrot.slane %v269, %v273
        %vm276 = vcmask 261120
        %v278 = vsel %vm276, %v263, 0
        %v281 = vsel %vm276, %v264, 0
        %283 = vmatprep.subr.mxu0 0.0
        %284 = vmatpush1.msra.mxu0 0.0
        %285 = vmatprep.subr.mxu0 0.0
        %286 = vmatpush1.msra.mxu0 0.0
        %287 = vmatprep.subr.mxu0 0.0
        %288 = vmatpush1.msra.mxu0 0.0
        %289 = vmatprep.subr.mxu0 0.0
        %290 = vmatpush1.msra.mxu0 0.0
        %291 = vmatprep.subr.mxu0 0.0
        %292 = vmatpush1.msra.mxu0 0.0
        %293 = vmatprep.subr.mxu0 0.0
        %294 = vmatpush1.msra.mxu0 0.0
        %295 = vmatprep.subr.mxu0 0.0
        %296 = vmatpush1.msra.mxu0 0.0
        %297 = vmatprep.subr.mxu0 0.0
        %298 = vmatpush1.msra.mxu0 0.0
        %299 = vmatprep.subr.mxu0 0.0
        %300 = vmatpush1.msra.mxu0 0.0
        %301 = vmatprep.subr.mxu0 0.0
        %302 = vmatpush1.msra.mxu0 0.0
        %303 = vmatprep.subr.mxu0 0.0
        %304 = vmatpush1.msra.mxu0 0.0
        %305 = vmatprep.subr.mxu0 0.0
        %306 = vmatpush1.msra.mxu0 0.0
        %307 = vmatprep.subr.mxu0 0.0
        %308 = vmatpush1.msra.mxu0 %v268
        %309 = vmatprep.subr.mxu0 0.0
        %310 = vmatpush1.msra.mxu0 %v267
        %311 = vmatprep.subr.mxu0 0.0
        %312 = vmatpush1.msra.mxu0 %v266
        %313 = vmatprep.subr.mxu0 0.0
        %314 = vmatpush1.msra.mxu0 %v265
        %315 = vmatprep.subr.mxu0 0.0
        %316 = vmatpush2.msra.mxu0 0.0
        %317 = vmatprep.subr.mxu0 0.0
        %318 = vmatpush2.msra.mxu0 0.0
        %319 = vmatprep.subr.mxu0 0.0
        %320 = vmatpush2.msra.mxu0 0.0
        %321 = vmatprep.subr.mxu0 0.0
        %322 = vmatpush2.msra.mxu0 0.0
        %323 = vmatprep.subr.mxu0 0.0
        %324 = vmatpush2.msra.mxu0 0.0
        %325 = vmatprep.subr.mxu0 0.0
        %326 = vmatpush2.msra.mxu0 0.0
        %327 = vmatprep.subr.mxu0 0.0
        %328 = vmatpush2.msra.mxu0 0.0
        %329 = vmatprep.subr.mxu0 0.0
        %330 = vmatpush2.msra.mxu0 0.0
        %331 = vmatprep.subr.mxu0 0.0
        %332 = vmatpush2.msra.mxu0 0.0
        %333 = vmatprep.subr.mxu0 0.0
        %334 = vmatpush2.msra.mxu0 0.0
        %335 = vmatprep.subr.mxu0 0.0
        %336 = vmatpush2.msra.mxu0 0.0
        %337 = vmatprep.subr.mxu0 0.0
        %338 = vmatpush2.msra.mxu0 0.0
        %339 = vmatprep.subr.mxu0 0.0
        %340 = vmatpush2.msra.mxu0 0.0
        %341 = vmatprep.subr.mxu0 0.0
        %342 = vmatpush2.msra.mxu0 0.0
        %343 = vmatprep.subr.mxu0 0.0
        %344 = vmatpush2.msra.mxu0 0.0
        %345 = vmatprep.subr.mxu0 0.0
        %346 = vmatpush2.msra.mxu0 0.0
        %347 = vmatprep.mubr.f32.mxu0 0.0
        %348 = vmatmul.mubr.f32.gmra.mxu0 %v278
        %v349 = vpop.f32.mrf.mxu0
        %v350 = vadd.f32 %v274, %v349
        %v351 = vpop.f32.mrf.mxu0
        %352 = vmatprep.mubr.f32.mxu0 0.0
        %353 = vmatmul.mubr.f32.gmra.mxu0 %v281
        %v354 = vpop.f32.mrf.mxu0
        %v355 = vadd.f32 %v274, %v354
        %v356 = vpop.f32.mrf.mxu0
        %357 = vdwg.mxu0
        %358 = vst [vmem:[%s257] sm:$0xff] %v350
        %359 = vst [vmem:[%s257 + $0x10] sm:$0xff] %v355
        %360 = vst [vmem:[%s257 + $0x8] sm:$0xff] -inf
        %361 = vst [vmem:[%s257 + $0x18] sm:$0xff] -inf
        %s362 = sand.u32 %s125, 1
        %s363 = scalar_lea.sflag [#allocation4], %s362
        %s364 = sand.u32 %s125, 1
        %s365 = smul.addr %s364, 32
        %s366 = scalar_lea.vmem [#allocation7], %s365
        // Predicated region
        $region41: #{tpu_custom_call.1} parent=31 // pred_check
          %p367 = pneg %p135
        $region42: #{tpu_custom_call.1} parent=31 // pred_check_branch
          %369 = sbr.rel (%p367) target = $region44
        $region43: #{tpu_custom_call.1} parent=31 // pred_region
          %s370 = smul.u32 2, %s28
          %s372 = ssub.s32 512, 512
          %373 = vsyncadd %s363, %s372
          %s374 = smul.addr %s370, 2
          %s375 = smul.addr %s27, 4
          %s376 = sadd.s32 %s374, %s375
          %s377 = smul.addr %s376, 128
          %s378 = scalar_lea.hbm %s3, %s377
          %s379 = sshll.u32 %s366, 4
          %s380 = int_to_ptr.vmem [resolvable:$true] %s379
          %385 = dma.vmem_to_hbm [thread:$0]  %s380, 512, %s378, %s363, 256, 256, 16
        $region44: #{tpu_custom_call.1} parent=31 // pred_fallthru
          _
      $region32: #{tpu_custom_call.1} parent=5 // pred_fallthru
        _
      %p386 = scmp.le.s32.totalorder 2, %s18
      // Predicated region
      $region45: #{tpu_custom_call.1} parent=5 // pred_check
        %p387 = pneg %p386
      $region46: #{tpu_custom_call.1} parent=5 // pred_check_branch
        %389 = sbr.rel (%p387) target = $region48
      $region47: #{tpu_custom_call.1} parent=5 // pred_region
        %s390 = ssub.s32 %s18, 2
        // Predicated region
        $region49: #{tpu_custom_call.1} parent=47 // pred_check
          %p391 = pneg %p141
        $region50: #{tpu_custom_call.1} parent=47 // pred_check_branch
          %393 = sbr.rel (%p391) target = $region52
        $region51: #{tpu_custom_call.1} parent=47 // pred_region
          %s394 = sand.u32 %s126, 1
          %s395 = scalar_lea.sflag [#allocation4], %s394
          %s396 = sand.u32 %s126, 1
          %s397 = smul.addr %s396, 32
          %s398 = scalar_lea.vmem [#allocation7], %s397
          %399 = dma.done %s395, 512
        $region52: #{tpu_custom_call.1} parent=47 // pred_fallthru
          _
      $region48: #{tpu_custom_call.1} parent=5 // pred_fallthru
        _
    $region6: #{tpu_custom_call.1} parent=1 // loop_footer
      %s22 = sadd.s32 1, %s18
    $region7: #{tpu_custom_call.1} parent=1 // loop_footer_branch
      %17 = sbr.rel target = $region3
    $region8: #{tpu_custom_call.1} parent=1 // loop_exit
      _
    %400 = vsyncpa [#allocation3], 1
    %s401 = scalar_lea.sflag [#allocation3], 1
    %402 = vsyncpa %s401, 1
    %403 = vsyncpa [#allocation6], 1
    %s404 = scalar_lea.sflag [#allocation6], 1
    %405 = vsyncpa %s404, 1
    %406 = vsyncpa [#allocation4], 1
    %s407 = scalar_lea.sflag [#allocation4], 1
    %408 = vsyncpa %s407, 1

</llo_original>
